<compile_context>
chip_gen: v7x
topology: tpu7x:2x2x1
jax: 0.10.0
libtpu: 0.0.40
codegen_flags: <defaults>
</compile_context>

<pallas_src>
import functools

import jax
import jax.numpy as jnp
from jax.experimental import pallas as pl
from jax.experimental.pallas import tpu as pltpu

LN_EPS = 1e-5        # PyTorch nn.LayerNorm default
LANE = 128           # TPU lane width
SUBL = 16            # batch-tile alignment (bf16 sublane packing = 16 rows/vreg)


def _round_up(x, m):
    return (x + m - 1) // m * m


def _layernorm_onepass(h, gamma, beta, inv_n):
    """LayerNorm over last axis, single-pass statistics, f32.

    `inv_n` is 1/true_width so zero-padded lane columns do not perturb the stats.
    """
    s1 = jnp.sum(h, axis=-1, keepdims=True)
    s2 = jnp.sum(h * h, axis=-1, keepdims=True)
    mu = s1 * inv_n
    var = jnp.maximum(s2 * inv_n - mu * mu, 0.0)
    return (h - mu) * jax.lax.rsqrt(var + LN_EPS) * gamma + beta


def actor_kernel(x_ref, w1_ref, bn1_ref, w2_ref, bn2_ref, w3_ref, b3_ref, o_ref,
                 *, inv_n1, inv_n2):
    # Packed per-layer vector params: row 0 = bias, row 1 = gamma, row 2 = beta.
    bn1 = bn1_ref[...]
    bn2 = bn2_ref[...]
    b1, g1, be1 = bn1[0:1, :], bn1[1:2, :], bn1[2:3, :]
    b2, g2, be2 = bn2[0:1, :], bn2[1:2, :], bn2[2:3, :]

    # Single cast of the input tile to bf16 for the first MXU operand.
    x_bf = x_ref[...].astype(jnp.bfloat16)

    # fc1 -> LayerNorm -> ReLU   (bf16 MXU operands, f32 accumulation / LN / ReLU)
    h = jnp.dot(x_bf, w1_ref[...], preferred_element_type=jnp.float32) + b1
    h = _layernorm_onepass(h, g1, be1, inv_n1)
    h = jnp.maximum(h, 0.0)

    # fc2 -> LayerNorm -> ReLU
    h = jnp.dot(h.astype(jnp.bfloat16), w2_ref[...],
                preferred_element_type=jnp.float32) + b2
    h = _layernorm_onepass(h, g2, be2, inv_n2)
    h = jnp.maximum(h, 0.0)

    # fc3 (lane-padded to a multiple of 128 output cols) -> Tanh -> bf16 store
    h = jnp.dot(h.astype(jnp.bfloat16), w3_ref[...],
                preferred_element_type=jnp.float32) + b3_ref[...]
    o_ref[...] = jnp.tanh(h).astype(o_ref.dtype)


def actor_forward(x, params, action_space, *, block_batch=1024):
    """x: (batch, obs) f32.  Returns (batch, action_space) f32."""
    w1, bn1, w2, bn2, w3p, b3p = (params["w1"], params["bn1"], params["w2"],
                                  params["bn2"], params["w3"], params["b3"])
    h1_true, h2_true = params["h1"], params["h2"]

    batch, obs = x.shape
    h1p = w1.shape[1]
    h2p = w2.shape[1]
    out_pad = w3p.shape[1]          # lane-padded action width (multiple of 128)

    # --- batch tiling ----------------------------------------------------------
    rb = _round_up(batch, SUBL)
    tb = min(block_batch, rb)
    # Guarantee >= 2 grid steps when there is enough work so both TensorCores on
    # v7x get a share of the (parallel) batch axis.
    if rb >= 2 * LANE and tb >= rb:
        tb = _round_up(rb // 2, SUBL)
    padded = _round_up(batch, tb)
    if padded != batch:
        x = jnp.pad(x, ((0, padded - batch), (0, 0)))
    grid = (padded // tb,)

    # --- VMEM budget (weights single-buffered, x/out double-buffered) ----------
    weight_bytes = 2 * (w1.size + w2.size + w3p.size) + 4 * (bn1.size + bn2.size + b3p.size)
    io_bytes = 2 * tb * obs * 4 + 2 * tb * out_pad * 2
    interm_bytes = 6 * tb * max(h1p, h2p) * 4     # f32 intermediates headroom
    vmem_needed = weight_bytes + io_bytes + interm_bytes
    vmem_limit = None
    if vmem_needed > 12 * 1024 * 1024:            # only override when it matters (v5e: 16 MiB default)
        vmem_limit = int(min(max(2 * vmem_needed, 16 * 1024 * 1024), 64 * 1024 * 1024))

    cost = pl.CostEstimate(
        flops=int(2 * padded * (obs * h1p + h1p * h2p + h2p * out_pad)),
        transcendentals=int(padded * (2 + out_pad)),     # 2 rsqrt rows + tanh lanes
        bytes_accessed=int(padded * obs * 4
                           + (w1.size + w2.size + w3p.size) * 2
                           + (bn1.size + bn2.size + b3p.size) * 4
                           + padded * out_pad * 2),
    )

    kernel = functools.partial(actor_kernel,
                               inv_n1=1.0 / float(h1_true),
                               inv_n2=1.0 / float(h2_true))

    # Resident operands: constant index_map -> single pipeline buffer.
    resident = dict(pipeline_mode=pl.Buffered(1))

    out = pl.pallas_call(
        kernel,
        out_shape=jax.ShapeDtypeStruct((padded, out_pad), jnp.bfloat16),
        grid_spec=pltpu.PrefetchScalarGridSpec(
            num_scalar_prefetch=0,
            grid=grid,
            in_specs=[
                pl.BlockSpec((tb, obs), lambda i: (i, 0)),                    # x (per tile)
                pl.BlockSpec((obs, h1p), lambda i: (0, 0), **resident),       # w1
                pl.BlockSpec((3, h1p), lambda i: (0, 0), **resident),         # bn1
                pl.BlockSpec((h1p, h2p), lambda i: (0, 0), **resident),       # w2
                pl.BlockSpec((3, h2p), lambda i: (0, 0), **resident),         # bn2
                pl.BlockSpec((h2p, out_pad), lambda i: (0, 0), **resident),   # w3
                pl.BlockSpec((1, out_pad), lambda i: (0, 0), **resident),     # b3
            ],
            out_specs=pl.BlockSpec((tb, out_pad), lambda i: (i, 0)),
        ),
        compiler_params=pltpu.CompilerParams(
            dimension_semantics=("parallel",),      # batch axis sharded across TCs on v7x
            vmem_limit_bytes=vmem_limit),
        cost_estimate=cost,
    )(x, w1, bn1, w2, bn2, w3p, b3p)

    return out[:batch, :action_space].astype(jnp.float32)


def init_actor_params(key, observation_space, action_space,
                      hidden_dim_1, hidden_dim_2):
    """Deterministic synthetic init mirroring DDPG fan-in uniform init.

    Weights stored (in, out) so the kernel computes x @ W + b (== PyTorch x @ W.T + b).
    Linear weights are bf16 (MXU operands); biases / LayerNorm affine stay f32.
    Hidden dims are zero-padded to multiples of 128 for lane-dense matmuls/LN; padded
    columns get gamma=beta=0 so they stay exactly zero through the network.
    """
    ks = jax.random.split(key, 6)

    def fanin_uniform(k, fan_in, shape):
        bound = 1.0 / (fan_in ** 0.5)
        return jax.random.uniform(k, shape, jnp.float32, -bound, bound)

    h1, h2 = hidden_dim_1, hidden_dim_2
    h1p, h2p = _round_up(h1, LANE), _round_up(h2, LANE)
    out_pad = _round_up(max(action_space, 1), LANE)

    # fc1
    w1 = fanin_uniform(ks[0], observation_space, (observation_space, h1))
    b1 = fanin_uniform(ks[1], observation_space, (1, h1))
    w1p = jnp.zeros((observation_space, h1p), jnp.float32).at[:, :h1].set(w1).astype(jnp.bfloat16)
    bn1 = jnp.zeros((3, h1p), jnp.float32)
    bn1 = bn1.at[0, :h1].set(b1[0])          # bias
    bn1 = bn1.at[1, :h1].set(1.0)            # gamma (0 on padded columns)
    # beta stays 0 everywhere (nn.LayerNorm default; padded columns inert)

    # fc2
    w2 = fanin_uniform(ks[2], h1, (h1, h2))
    b2 = fanin_uniform(ks[3], h1, (1, h2))
    w2p = jnp.zeros((h1p, h2p), jnp.float32).at[:h1, :h2].set(w2).astype(jnp.bfloat16)
    bn2 = jnp.zeros((3, h2p), jnp.float32)
    bn2 = bn2.at[0, :h2].set(b2[0])
    bn2 = bn2.at[1, :h2].set(1.0)

    # fc3: small uniform init (DDPG last layer), lane-padded output columns.
    w3 = jax.random.uniform(ks[4], (h2, action_space), jnp.float32, -3e-3, 3e-3)
    b3 = jax.random.uniform(ks[5], (1, action_space), jnp.float32, -3e-3, 3e-3)
    w3p = jnp.zeros((h2p, out_pad), jnp.float32).at[:h2, :action_space].set(w3).astype(jnp.bfloat16)
    b3p = jnp.zeros((1, out_pad), jnp.float32).at[:, :action_space].set(b3)

    return {
        "w1": w1p, "bn1": bn1, "w2": w2p, "bn2": bn2, "w3": w3p, "b3": b3p,
        "h1": h1, "h2": h2,   # true (unpadded) LayerNorm widths
    }


if __name__ == "__main__":
    # Small shapes consistent with the module (defaults 300/400 scaled down).
    batch = 8
    observation_space = 32
    action_space = 8
    hidden_dim_1 = 128
    hidden_dim_2 = 256

    key = jax.random.PRNGKey(0)
    pkey, xkey = jax.random.split(key)
    params = init_actor_params(pkey, observation_space, action_space,
                               hidden_dim_1, hidden_dim_2)
    x = jax.random.normal(xkey, (batch, observation_space), jnp.float32)

    out = actor_forward(x, params, action_space)
    jax.block_until_ready(out)

    assert out.shape == (batch, action_space)
    assert bool(jnp.all(jnp.abs(out) <= 1.0))     # tanh output range
    assert bool(jnp.all(jnp.isfinite(out)))

    print("KERNEL_OK")
</pallas_src>

<mosaic_0001>
module attributes {stable_mosaic.version = 11 : i64} {
  func.func @actor_kernel(%arg0: i32, %arg1: memref<16x32xf32, #tpu.memory_space<vmem>>, %arg2: memref<32x128xbf16, #tpu.memory_space<vmem>>, %arg3: memref<3x128xf32, #tpu.memory_space<vmem>>, %arg4: memref<128x256xbf16, #tpu.memory_space<vmem>>, %arg5: memref<3x256xf32, #tpu.memory_space<vmem>>, %arg6: memref<256x128xbf16, #tpu.memory_space<vmem>>, %arg7: memref<1x128xf32, #tpu.memory_space<vmem>>, %arg8: memref<16x128xbf16, #tpu.memory_space<vmem>>) attributes {dimension_semantics = [#tpu.dimension_semantics<parallel>], iteration_bounds = array<i64: 1>, scalar_prefetch = 0 : i64, scratch_operands = 0 : i64, tpu.core_type = #tpu.core_type<tc>, window_params = [{transform_indices = @transform_0, window_bounds = array<i64: 16, 32>}, {pipeline_mode = #tpu.pipeline_mode<synchronous>, transform_indices = @transform_1, window_bounds = array<i64: 32, 128>}, {pipeline_mode = #tpu.pipeline_mode<synchronous>, transform_indices = @transform_2, window_bounds = array<i64: 3, 128>}, {pipeline_mode = #tpu.pipeline_mode<synchronous>, transform_indices = @transform_3, window_bounds = array<i64: 128, 256>}, {pipeline_mode = #tpu.pipeline_mode<synchronous>, transform_indices = @transform_4, window_bounds = array<i64: 3, 256>}, {pipeline_mode = #tpu.pipeline_mode<synchronous>, transform_indices = @transform_5, window_bounds = array<i64: 256, 128>}, {pipeline_mode = #tpu.pipeline_mode<synchronous>, transform_indices = @transform_6, window_bounds = array<i64: 1, 128>}, {transform_indices = @transform_7, window_bounds = array<i64: 16, 128>}]} {
    %c0 = arith.constant 0 : index
    %c0_0 = arith.constant 0 : index
    %0 = vector.load %arg3[%c0, %c0_0] : memref<3x128xf32, #tpu.memory_space<vmem>>, vector<3x128xf32>
    %c0_1 = arith.constant 0 : index
    %c0_2 = arith.constant 0 : index
    %1 = vector.load %arg5[%c0_1, %c0_2] : memref<3x256xf32, #tpu.memory_space<vmem>>, vector<3x256xf32>
    %2 = vector.extract_strided_slice %0 {offsets = [0, 0], sizes = [1, 128], strides = [1, 1]} : vector<3x128xf32> to vector<1x128xf32>
    %3 = vector.extract_strided_slice %0 {offsets = [1, 0], sizes = [1, 128], strides = [1, 1]} : vector<3x128xf32> to vector<1x128xf32>
    %4 = vector.extract_strided_slice %0 {offsets = [2, 0], sizes = [1, 128], strides = [1, 1]} : vector<3x128xf32> to vector<1x128xf32>
    %5 = vector.extract_strided_slice %1 {offsets = [0, 0], sizes = [1, 256], strides = [1, 1]} : vector<3x256xf32> to vector<1x256xf32>
    %6 = vector.extract_strided_slice %1 {offsets = [1, 0], sizes = [1, 256], strides = [1, 1]} : vector<3x256xf32> to vector<1x256xf32>
    %7 = vector.extract_strided_slice %1 {offsets = [2, 0], sizes = [1, 256], strides = [1, 1]} : vector<3x256xf32> to vector<1x256xf32>
    %c0_3 = arith.constant 0 : index
    %c0_4 = arith.constant 0 : index
    %8 = vector.load %arg1[%c0_3, %c0_4] : memref<16x32xf32, #tpu.memory_space<vmem>>, vector<16x32xf32>
    %9 = arith.truncf %8 : vector<16x32xf32> to vector<16x32xbf16>
    %c0_5 = arith.constant 0 : index
    %c0_6 = arith.constant 0 : index
    %10 = vector.load %arg2[%c0_5, %c0_6] : memref<32x128xbf16, #tpu.memory_space<vmem>>, vector<32x128xbf16>
    %cst = arith.constant dense<0.000000e+00> : vector<16x128xf32>
    %11 = tpu.matmul %9, %10, %cst {dimension_numbers = #tpu.dot_dimension_numbers<[1], [0], [0], [1], [0, 0, 1, 1], [], []>} : vector<16x32xbf16>, vector<32x128xbf16>, vector<16x128xf32> -> vector<16x128xf32>
    %12 = vector.broadcast %2 : vector<1x128xf32> to vector<16x128xf32>
    %13 = arith.addf %11, %12 : vector<16x128xf32>
    %cst_7 = arith.constant dense<0.000000e+00> : vector<16xf32>
    %14 = vector.multi_reduction <add>, %13, %cst_7 [1] : vector<16x128xf32> to vector<16xf32>
    %15 = vector.shape_cast %14 : vector<16xf32> to vector<16x1xf32>
    %16 = arith.mulf %13, %13 : vector<16x128xf32>
    %cst_8 = arith.constant dense<0.000000e+00> : vector<16xf32>
    %17 = vector.multi_reduction <add>, %16, %cst_8 [1] : vector<16x128xf32> to vector<16xf32>
    %18 = vector.shape_cast %17 : vector<16xf32> to vector<16x1xf32>
    %cst_9 = arith.constant 7.812500e-03 : f32
    %19 = vector.broadcast %cst_9 : f32 to vector<16x1xf32>
    %20 = arith.mulf %15, %19 : vector<16x1xf32>
    %cst_10 = arith.constant 7.812500e-03 : f32
    %21 = vector.broadcast %cst_10 : f32 to vector<16x1xf32>
    %22 = arith.mulf %18, %21 : vector<16x1xf32>
    %23 = arith.mulf %20, %20 : vector<16x1xf32>
    %24 = arith.subf %22, %23 : vector<16x1xf32>
    %cst_11 = arith.constant 0.000000e+00 : f32
    %25 = vector.broadcast %cst_11 : f32 to vector<16x1xf32>
    %26 = arith.maximumf %24, %25 : vector<16x1xf32>
    %27 = vector.broadcast %20 : vector<16x1xf32> to vector<16x128xf32>
    %28 = arith.subf %13, %27 : vector<16x128xf32>
    %cst_12 = arith.constant 9.99999974E-6 : f32
    %29 = vector.broadcast %cst_12 : f32 to vector<16x1xf32>
    %30 = arith.addf %26, %29 : vector<16x1xf32>
    %31 = math.rsqrt %30 : vector<16x1xf32>
    %32 = vector.broadcast %31 : vector<16x1xf32> to vector<16x128xf32>
    %33 = arith.mulf %28, %32 : vector<16x128xf32>
    %34 = vector.broadcast %3 : vector<1x128xf32> to vector<16x128xf32>
    %35 = arith.mulf %33, %34 : vector<16x128xf32>
    %36 = vector.broadcast %4 : vector<1x128xf32> to vector<16x128xf32>
    %37 = arith.addf %35, %36 : vector<16x128xf32>
    %cst_13 = arith.constant 0.000000e+00 : f32
    %38 = vector.broadcast %cst_13 : f32 to vector<16x128xf32>
    %39 = arith.maximumf %37, %38 : vector<16x128xf32>
    %40 = arith.truncf %39 : vector<16x128xf32> to vector<16x128xbf16>
    %c0_14 = arith.constant 0 : index
    %c0_15 = arith.constant 0 : index
    %41 = vector.load %arg4[%c0_14, %c0_15] : memref<128x256xbf16, #tpu.memory_space<vmem>>, vector<128x256xbf16>
    %cst_16 = arith.constant dense<0.000000e+00> : vector<16x256xf32>
    %42 = tpu.matmul %40, %41, %cst_16 {dimension_numbers = #tpu.dot_dimension_numbers<[1], [0], [0], [1], [0, 0, 1, 1], [], []>} : vector<16x128xbf16>, vector<128x256xbf16>, vector<16x256xf32> -> vector<16x256xf32>
    %43 = vector.broadcast %5 : vector<1x256xf32> to vector<16x256xf32>
    %44 = arith.addf %42, %43 : vector<16x256xf32>
    %cst_17 = arith.constant dense<0.000000e+00> : vector<16xf32>
    %45 = vector.multi_reduction <add>, %44, %cst_17 [1] : vector<16x256xf32> to vector<16xf32>
    %46 = vector.shape_cast %45 : vector<16xf32> to vector<16x1xf32>
    %47 = arith.mulf %44, %44 : vector<16x256xf32>
    %cst_18 = arith.constant dense<0.000000e+00> : vector<16xf32>
    %48 = vector.multi_reduction <add>, %47, %cst_18 [1] : vector<16x256xf32> to vector<16xf32>
    %49 = vector.shape_cast %48 : vector<16xf32> to vector<16x1xf32>
    %cst_19 = arith.constant 3.906250e-03 : f32
    %50 = vector.broadcast %cst_19 : f32 to vector<16x1xf32>
    %51 = arith.mulf %46, %50 : vector<16x1xf32>
    %cst_20 = arith.constant 3.906250e-03 : f32
    %52 = vector.broadcast %cst_20 : f32 to vector<16x1xf32>
    %53 = arith.mulf %49, %52 : vector<16x1xf32>
    %54 = arith.mulf %51, %51 : vector<16x1xf32>
    %55 = arith.subf %53, %54 : vector<16x1xf32>
    %cst_21 = arith.constant 0.000000e+00 : f32
    %56 = vector.broadcast %cst_21 : f32 to vector<16x1xf32>
    %57 = arith.maximumf %55, %56 : vector<16x1xf32>
    %58 = vector.broadcast %51 : vector<16x1xf32> to vector<16x256xf32>
    %59 = arith.subf %44, %58 : vector<16x256xf32>
    %cst_22 = arith.constant 9.99999974E-6 : f32
    %60 = vector.broadcast %cst_22 : f32 to vector<16x1xf32>
    %61 = arith.addf %57, %60 : vector<16x1xf32>
    %62 = math.rsqrt %61 : vector<16x1xf32>
    %63 = vector.broadcast %62 : vector<16x1xf32> to vector<16x256xf32>
    %64 = arith.mulf %59, %63 : vector<16x256xf32>
    %65 = vector.broadcast %6 : vector<1x256xf32> to vector<16x256xf32>
    %66 = arith.mulf %64, %65 : vector<16x256xf32>
    %67 = vector.broadcast %7 : vector<1x256xf32> to vector<16x256xf32>
    %68 = arith.addf %66, %67 : vector<16x256xf32>
    %cst_23 = arith.constant 0.000000e+00 : f32
    %69 = vector.broadcast %cst_23 : f32 to vector<16x256xf32>
    %70 = arith.maximumf %68, %69 : vector<16x256xf32>
    %71 = arith.truncf %70 : vector<16x256xf32> to vector<16x256xbf16>
    %c0_24 = arith.constant 0 : index
    %c0_25 = arith.constant 0 : index
    %72 = vector.load %arg6[%c0_24, %c0_25] : memref<256x128xbf16, #tpu.memory_space<vmem>>, vector<256x128xbf16>
    %cst_26 = arith.constant dense<0.000000e+00> : vector<16x128xf32>
    %73 = tpu.matmul %71, %72, %cst_26 {dimension_numbers = #tpu.dot_dimension_numbers<[1], [0], [0], [1], [0, 0, 1, 1], [], []>} : vector<16x256xbf16>, vector<256x128xbf16>, vector<16x128xf32> -> vector<16x128xf32>
    %c0_27 = arith.constant 0 : index
    %c0_28 = arith.constant 0 : index
    %74 = vector.load %arg7[%c0_27, %c0_28] : memref<1x128xf32, #tpu.memory_space<vmem>>, vector<1x128xf32>
    %75 = vector.broadcast %74 : vector<1x128xf32> to vector<16x128xf32>
    %76 = arith.addf %73, %75 : vector<16x128xf32>
    %77 = math.tanh %76 : vector<16x128xf32>
    %78 = arith.truncf %77 : vector<16x128xf32> to vector<16x128xbf16>
    %c0_29 = arith.constant 0 : index
    %c0_30 = arith.constant 0 : index
    %79 = vector.load %arg8[%c0_29, %c0_30] : memref<16x128xbf16, #tpu.memory_space<vmem>>, vector<16x128xbf16>
    tpu.vector_store %arg8[%c0_29, %c0_30], %78 {strides = array<i32>} : memref<16x128xbf16, #tpu.memory_space<vmem>>, vector<16x128xbf16>,
    return
  }
  func.func @transform_0(%arg0: i32) -> (i32, i32) {
    %c0_i32 = arith.constant 0 : i32
    %c0_i32_0 = arith.constant 0 : i32
    return %arg0, %c0_i32 : i32, i32
  }
  func.func @transform_1(%arg0: i32) -> (i32, i32) {
    %c0_i32 = arith.constant 0 : i32
    %c0_i32_0 = arith.constant 0 : i32
    %c0_i32_1 = arith.constant 0 : i32
    return %c0_i32, %c0_i32_0 : i32, i32
  }
  func.func @transform_2(%arg0: i32) -> (i32, i32) {
    %c0_i32 = arith.constant 0 : i32
    %c0_i32_0 = arith.constant 0 : i32
    %c0_i32_1 = arith.constant 0 : i32
    return %c0_i32, %c0_i32_0 : i32, i32
  }
  func.func @transform_3(%arg0: i32) -> (i32, i32) {
    %c0_i32 = arith.constant 0 : i32
    %c0_i32_0 = arith.constant 0 : i32
    %c0_i32_1 = arith.constant 0 : i32
    return %c0_i32, %c0_i32_0 : i32, i32
  }
  func.func @transform_4(%arg0: i32) -> (i32, i32) {
    %c0_i32 = arith.constant 0 : i32
    %c0_i32_0 = arith.constant 0 : i32
    %c0_i32_1 = arith.constant 0 : i32
    return %c0_i32, %c0_i32_0 : i32, i32
  }
  func.func @transform_5(%arg0: i32) -> (i32, i32) {
    %c0_i32 = arith.constant 0 : i32
    %c0_i32_0 = arith.constant 0 : i32
    %c0_i32_1 = arith.constant 0 : i32
    return %c0_i32, %c0_i32_0 : i32, i32
  }
  func.func @transform_6(%arg0: i32) -> (i32, i32) {
    %c0_i32 = arith.constant 0 : i32
    %c0_i32_0 = arith.constant 0 : i32
    %c0_i32_1 = arith.constant 0 : i32
    return %c0_i32, %c0_i32_0 : i32, i32
  }
  func.func @transform_7(%arg0: i32) -> (i32, i32) {
    %c0_i32 = arith.constant 0 : i32
    %c0_i32_0 = arith.constant 0 : i32
    return %arg0, %c0_i32 : i32, i32
  }
}

</mosaic_0001>

<llo_original>
// kernel: tpu_custom_call.1
$region0: #{tpu_custom_call.1}
  #allocation0 [shape = 'u32[]', space=smem, size = 0x4, offset = 0x4, fixed_abs, tag = 'smem constant byte address 0x4 - core index']
  #allocation1 [shape = 'u32[144,128]{1,0:T(1,128)}', space=vmem, size = 0x12000, scoped, tag = 'internal scratch']
  %s0 = inlined_call_operand.hbm [shape: f32[16,32], index: 0, kind: input, shape index: {}]
  %s1 = inlined_call_operand.hbm [shape: bf16[32,128], index: 1, kind: input, shape index: {}]
  %s2 = inlined_call_operand.vmem [shape: f32[3,128], index: 2, kind: input, shape index: {}]
  %s3 = inlined_call_operand.hbm [shape: bf16[128,256], index: 3, kind: input, shape index: {}]
  %s4 = inlined_call_operand.vmem [shape: f32[3,256], index: 4, kind: input, shape index: {}]
  %s5 = inlined_call_operand.hbm [shape: bf16[256,128], index: 5, kind: input, shape index: {}]
  %s6 = inlined_call_operand.vmem [shape: f32[1,128], index: 6, kind: input, shape index: {}]
  %s7 = inlined_call_operand.hbm [shape: bf16[16,128], index: 7, kind: output, shape index: {}]
  %s8 = sld [smem:[#allocation0]]
  $region54: #{tpu_custom_call.1} parent=0
    _
  %s10 = ssub.s32 1, %s8
  %s11 = scalar_select 0, %s10, %s8
  $region1: #{tpu_custom_call.1} parent=0
    #allocation2 [shape = 'u8[8192]{0}', space=vmem, size = 0x2000, scoped, tag = 'input window, operand 0, single buffered']
    #allocation3 [shape = 's32[1]{0}', space=sflag, size = 0x4, scoped, tag = 'scoped memory for tpu_custom_call.1']
    #allocation4 [shape = 's32[1]{0}', space=sflag, size = 0x4, scoped, tag = 'scoped memory for tpu_custom_call.1']
    #allocation5 [shape = 'u8[8192]{0}', space=vmem, size = 0x2000, scoped, tag = 'input window, operand 1, single buffered']
    #allocation6 [shape = 's32[1]{0}', space=sflag, size = 0x4, scoped, tag = 'scoped memory for tpu_custom_call.1']
    #allocation7 [shape = 'u8[65536]{0}', space=vmem, size = 0x10000, scoped, tag = 'input window, operand 3, single buffered']
    #allocation8 [shape = 'u8[65536]{0}', space=vmem, size = 0x10000, scoped, tag = 'input window, operand 5, single buffered']
    #allocation9 [shape = 's32[1]{0}', space=sflag, size = 0x4, scoped, tag = 'scoped memory for tpu_custom_call.1']
    #allocation10 [shape = 'u8[4096]{0}', space=vmem, size = 0x1000, scoped, tag = 'output window, operand 0, single buffered']
    %12 = vsyncpa [#allocation3], 0
    %13 = vsyncpa [#allocation6], 0
    %14 = vsyncpa [#allocation9], 0
    %15 = vsyncpa [#allocation4], 0
    // Predicated region
    $region2: #{tpu_custom_call.1} parent=1 // pred_check
      _
    $region3: #{tpu_custom_call.1} parent=1 // pred_check_branch
      %17 = sbr.rel (0) target = $region5
    $region4: #{tpu_custom_call.1} parent=1 // pred_region
      %s19 = ssub.s32 256, 256
      %20 = vsyncadd [#allocation3], %s19
      %s21 = sshll.u32 [#allocation2], 4
      %s22 = int_to_ptr.vmem [resolvable:$true] %s21
      %27 = dma.hbm_to_vmem [thread:$0]  %s0, 256, %s22, [#allocation3], 128, 128, 8
    $region5: #{tpu_custom_call.1} parent=1 // pred_fallthru
      _
    // Predicated region
    $region6: #{tpu_custom_call.1} parent=1 // pred_check
      _
    $region7: #{tpu_custom_call.1} parent=1 // pred_check_branch
      %29 = sbr.rel (0) target = $region9
    $region8: #{tpu_custom_call.1} parent=1 // pred_region
      %s31 = ssub.s32 256, 256
      %32 = vsyncadd [#allocation6], %s31
      %s33 = sshll.u32 [#allocation5], 4
      %s34 = int_to_ptr.vmem [resolvable:$true] %s33
      %39 = dma.hbm_to_vmem [thread:$0]  %s1, 256, %s34, [#allocation6], 64, 64, 4
    $region9: #{tpu_custom_call.1} parent=1 // pred_fallthru
      _
    // Predicated region
    $region10: #{tpu_custom_call.1} parent=1 // pred_check
      _
    $region11: #{tpu_custom_call.1} parent=1 // pred_check_branch
      %41 = sbr.rel (0) target = $region13
    $region12: #{tpu_custom_call.1} parent=1 // pred_region
      _
    $region13: #{tpu_custom_call.1} parent=1 // pred_fallthru
      _
    // Predicated region
    $region14: #{tpu_custom_call.1} parent=1 // pred_check
      _
    $region15: #{tpu_custom_call.1} parent=1 // pred_check_branch
      %43 = sbr.rel (0) target = $region17
    $region16: #{tpu_custom_call.1} parent=1 // pred_region
      %s45 = ssub.s32 2048, 2048
      %46 = vsyncadd [#allocation6], %s45
      %s47 = sshll.u32 [#allocation7], 4
      %s48 = int_to_ptr.vmem [resolvable:$true] %s47
      %53 = dma.hbm_to_vmem [thread:$0]  %s3, 2048, %s48, [#allocation6], 128, 128, 8
    $region17: #{tpu_custom_call.1} parent=1 // pred_fallthru
      _
    // Predicated region
    $region18: #{tpu_custom_call.1} parent=1 // pred_check
      _
    $region19: #{tpu_custom_call.1} parent=1 // pred_check_branch
      %55 = sbr.rel (0) target = $region21
    $region20: #{tpu_custom_call.1} parent=1 // pred_region
      _
    $region21: #{tpu_custom_call.1} parent=1 // pred_fallthru
      _
    // Predicated region
    $region22: #{tpu_custom_call.1} parent=1 // pred_check
      _
    $region23: #{tpu_custom_call.1} parent=1 // pred_check_branch
      %57 = sbr.rel (0) target = $region25
    $region24: #{tpu_custom_call.1} parent=1 // pred_region
      %s59 = ssub.s32 2048, 2048
      %60 = vsyncadd [#allocation9], %s59
      %s61 = sshll.u32 [#allocation8], 4
      %s62 = int_to_ptr.vmem [resolvable:$true] %s61
      %67 = dma.hbm_to_vmem [thread:$0]  %s5, 2048, %s62, [#allocation9], 64, 64, 4
    $region25: #{tpu_custom_call.1} parent=1 // pred_fallthru
      _
    // Predicated region
    $region26: #{tpu_custom_call.1} parent=1 // pred_check
      _
    $region27: #{tpu_custom_call.1} parent=1 // pred_check_branch
      %69 = sbr.rel (0) target = $region29
    $region28: #{tpu_custom_call.1} parent=1 // pred_region
      _
    $region29: #{tpu_custom_call.1} parent=1 // pred_fallthru
      _
    // Predicated region
    $region30: #{tpu_custom_call.1} parent=1 // pred_check
      _
    $region31: #{tpu_custom_call.1} parent=1 // pred_check_branch
      %71 = sbr.rel (0) target = $region33
    $region32: #{tpu_custom_call.1} parent=1 // pred_region
      %72 = dma.done [#allocation3], 256
    $region33: #{tpu_custom_call.1} parent=1 // pred_fallthru
      _
    // Predicated region
    $region34: #{tpu_custom_call.1} parent=1 // pred_check
      _
    $region35: #{tpu_custom_call.1} parent=1 // pred_check_branch
      %74 = sbr.rel (0) target = $region37
    $region36: #{tpu_custom_call.1} parent=1 // pred_region
      %75 = dma.done [#allocation6], 256
    $region37: #{tpu_custom_call.1} parent=1 // pred_fallthru
      _
    // Predicated region
    $region38: #{tpu_custom_call.1} parent=1 // pred_check
      _
    $region39: #{tpu_custom_call.1} parent=1 // pred_check_branch
      %77 = sbr.rel (0) target = $region41
    $region40: #{tpu_custom_call.1} parent=1 // pred_region
      %78 = dma.done [#allocation6], 2048
    $region41: #{tpu_custom_call.1} parent=1 // pred_fallthru
      _
    // Predicated region
    $region42: #{tpu_custom_call.1} parent=1 // pred_check
      _
    $region43: #{tpu_custom_call.1} parent=1 // pred_check_branch
      %80 = sbr.rel (0) target = $region45
    $region44: #{tpu_custom_call.1} parent=1 // pred_region
      %81 = dma.done [#allocation9], 2048
    $region45: #{tpu_custom_call.1} parent=1 // pred_fallthru
      _
    %v83 = vld [vmem:[%s2] sm:$0x7]
    %v84 = vld [vmem:[%s4] sm:$0x77]
    %v85 = vld [vmem:[#allocation2] sm:$0xff]
    %v86 = vld [vmem:[#allocation2 + $0x8] sm:$0xff]
    %v87 = vpack.c.bf16 %v86, %v85
    %v88 = vld [vmem:[#allocation5] sm:$0xf]
    %v89 = vld [vmem:[#allocation5 + $0x4] sm:$0xf]
    %v90 = vld [vmem:[#allocation5 + $0x8] sm:$0xf]
    %v91 = vld [vmem:[#allocation5 + $0xc] sm:$0xf]
    %v92 = vlaneseq
    %v93 = vshrl.u32 %v92, 7
    %v94 = vsub.s32 0, %v93
    %v95 = vrot.slane %v83, %v94
    %v100 = vunpack.c.l.b16 %v88
    %v101 = vunpack.c.l.b16 %v89
    %v102 = vunpack.c.l.b16 %v90
    %v103 = vunpack.c.l.b16 %v91
    %v104 = vpack.c.b16 %v101, %v100
    %v105 = vpack.c.b16 %v103, %v102
    %vm108 = vcmask 261120
    %v110 = vsel %vm108, %v87, 0
    %112 = vmatprep.subr.bf16.mxu0 0
    %113 = vmatpush1.bf16.msra.mxu0 %v104
    %114 = vmatprep.subr.bf16.mxu0 0
    %115 = vmatpush1.bf16.msra.mxu0 %v105
    %116 = vmatprep.subr.bf16.mxu0 0
    %117 = vmatpush1.bf16.msra.mxu0 0
    %118 = vmatprep.subr.bf16.mxu0 0
    %119 = vmatpush1.bf16.msra.mxu0 0
    %120 = vmatprep.subr.bf16.mxu0 0
    %121 = vmatpush1.bf16.msra.mxu0 0
    %122 = vmatprep.subr.bf16.mxu0 0
    %123 = vmatpush1.bf16.msra.mxu0 0
    %124 = vmatprep.subr.bf16.mxu0 0
    %125 = vmatpush1.bf16.msra.mxu0 0
    %126 = vmatprep.subr.bf16.mxu0 0
    %127 = vmatpush1.bf16.msra.mxu0 0
    %128 = vmatprep.subr.bf16.mxu0 0
    %129 = vmatpush1.bf16.msra.mxu0 0
    %130 = vmatprep.subr.bf16.mxu0 0
    %131 = vmatpush1.bf16.msra.mxu0 0
    %132 = vmatprep.subr.bf16.mxu0 0
    %133 = vmatpush1.bf16.msra.mxu0 0
    %134 = vmatprep.subr.bf16.mxu0 0
    %135 = vmatpush1.bf16.msra.mxu0 0
    %136 = vmatprep.subr.bf16.mxu0 0
    %137 = vmatpush1.bf16.msra.mxu0 0
    %138 = vmatprep.subr.bf16.mxu0 0
    %139 = vmatpush1.bf16.msra.mxu0 0
    %140 = vmatprep.subr.bf16.mxu0 0
    %141 = vmatpush1.bf16.msra.mxu0 0
    %142 = vmatprep.subr.bf16.mxu0 0
    %143 = vmatpush1.bf16.msra.mxu0 0
    %144 = vmatprep.mubr.bf16.mxu0 0
    %145 = vmatmul.mubr.bf16.gmra.mrb[0].mxu0 %v110
    %v146 = vpop.f32.mrb[0].mxu0
    %v147 = vadd.f32 %v95, %v146
    %v148 = vpop.f32.mrb[0].mxu0
    %v149 = vpop.f32.mrb[0].mxu0
    %v150 = vadd.f32 %v95, %v149
    %v151 = vpop.f32.mrb[0].mxu0
    %152 = vdwg.mxu0
    %153 = vadd.xlane.f32.xlu0 %v147
    %v154 = vpop.xlane.xlu0 %153
    %155 = vadd.xlane.f32.xlu0 %v150
    %v156 = vpop.xlane.xlu0 %155
    %v157 = vmul.f32 %v147, %v147
    %v158 = vmul.f32 %v150, %v150
    %159 = vadd.xlane.f32.xlu0 %v157
    %v160 = vpop.xlane.xlu0 %159
    %161 = vadd.xlane.f32.xlu0 %v158
    %v162 = vpop.xlane.xlu0 %161
    %v163 = vmul.f32 %v154, 0.0078125
    %v164 = vmul.f32 %v156, 0.0078125
    %v165 = vmul.f32 %v160, 0.0078125
    %v166 = vmul.f32 %v162, 0.0078125
    %v167 = vmul.f32 %v163, %v163
    %v168 = vmul.f32 %v164, %v164
    %v169 = vsub.f32 %v165, %v167
    %v170 = vsub.f32 %v166, %v168
    %v171 = vmax.f32 %v169, 0.0
    %v172 = vmax.f32 %v170, 0.0
    %v173 = vsub.f32 %v147, %v163
    %v174 = vsub.f32 %v150, %v164
    %v175 = vadd.f32 %v171, 1e-05
    %v176 = vadd.f32 %v172, 1e-05
    %v177 = vrsqrt.pop %v175
    %v178 = vrsqrt.pop %v176
    %v179 = vmul.f32 %v173, %v177
    %v180 = vmul.f32 %v174, %v178
    %v181 = vlaneseq
    %v182 = vshrl.u32 %v181, 7
    %v183 = vsub.s32 1, %v182
    %v184 = vrot.slane %v83, %v183
    %v185 = vmul.f32 %v179, %v184
    %v186 = vmul.f32 %v180, %v184
    %v187 = vlaneseq
    %v188 = vshrl.u32 %v187, 7
    %v189 = vsub.s32 2, %v188
    %v190 = vrot.slane %v83, %v189
    %v191 = vadd.f32 %v185, %v190
    %v192 = vadd.f32 %v186, %v190
    %v193 = vmax.f32 %v191, 0.0
    %v194 = vmax.f32 %v192, 0.0
    %v195 = vpack.c.bf16 %v194, %v193
    %v196 = vld [vmem:[#allocation7] sm:$0xff]
    %v197 = vld [vmem:[#allocation7 + $0x8] sm:$0xff]
    %v198 = vld [vmem:[#allocation7 + $0x10] sm:$0xff]
    %v199 = vld [vmem:[#allocation7 + $0x18] sm:$0xff]
    %v200 = vld [vmem:[#allocation7 + $0x20] sm:$0xff]
    %v201 = vld [vmem:[#allocation7 + $0x28] sm:$0xff]
    %v202 = vld [vmem:[#allocation7 + $0x30] sm:$0xff]
    %v203 = vld [vmem:[#allocation7 + $0x38] sm:$0xff]
    %v204 = vld [vmem:[#allocation7 + $0x40] sm:$0xff]
    %v205 = vld [vmem:[#allocation7 + $0x48] sm:$0xff]
    %v206 = vld [vmem:[#allocation7 + $0x50] sm:$0xff]
    %v207 = vld [vmem:[#allocation7 + $0x58] sm:$0xff]
    %v208 = vld [vmem:[#allocation7 + $0x60] sm:$0xff]
    %v209 = vld [vmem:[#allocation7 + $0x68] sm:$0xff]
    %v210 = vld [vmem:[#allocation7 + $0x70] sm:$0xff]
    %v211 = vld [vmem:[#allocation7 + $0x78] sm:$0xff]
    %v213 = vlaneseq
    %v214 = vshrl.u32 %v213, 7
    %v215 = vsub.s32 0, %v214
    %v216 = vrot.slane %v84, %v215
    %v217 = vlaneseq
    %v218 = vshrl.u32 %v217, 7
    %v219 = vsub.s32 4, %v218
    %v220 = vrot.slane %v84, %v219
    %v223 = vlaneseq
    %v224 = vshrl.u32 %v223, 7
    %v225 = vsub.s32 0, %v224
    %v226 = vrot.slane %v216, %v225
    %v227 = vlaneseq
    %v228 = vshrl.u32 %v227, 7
    %v229 = vsub.s32 0, %v228
    %v230 = vrot.slane %v220, %v229
    %v247 = vunpack.c.l.b16 %v196
    %v248 = vunpack.c.h.b16 %v196
    %v249 = vunpack.c.l.b16 %v197
    %v250 = vunpack.c.h.b16 %v197
    %v251 = vunpack.c.l.b16 %v198
    %v252 = vunpack.c.h.b16 %v198
    %v253 = vunpack.c.l.b16 %v199
    %v254 = vunpack.c.h.b16 %v199
    %v255 = vunpack.c.l.b16 %v200
    %v256 = vunpack.c.h.b16 %v200
    %v257 = vunpack.c.l.b16 %v201
    %v258 = vunpack.c.h.b16 %v201
    %v259 = vunpack.c.l.b16 %v202
    %v260 = vunpack.c.h.b16 %v202
    %v261 = vunpack.c.l.b16 %v203
    %v262 = vunpack.c.h.b16 %v203
    %v263 = vunpack.c.l.b16 %v204
    %v264 = vunpack.c.h.b16 %v204
    %v265 = vunpack.c.l.b16 %v205
    %v266 = vunpack.c.h.b16 %v205
    %v267 = vunpack.c.l.b16 %v206
    %v268 = vunpack.c.h.b16 %v206
    %v269 = vunpack.c.l.b16 %v207
    %v270 = vunpack.c.h.b16 %v207
    %v271 = vunpack.c.l.b16 %v208
    %v272 = vunpack.c.h.b16 %v208
    %v273 = vunpack.c.l.b16 %v209
    %v274 = vunpack.c.h.b16 %v209
    %v275 = vunpack.c.l.b16 %v210
    %v276 = vunpack.c.h.b16 %v210
    %v277 = vunpack.c.l.b16 %v211
    %v278 = vunpack.c.h.b16 %v211
    %v279 = vpack.c.b16 %v249, %v247
    %v280 = vpack.c.b16 %v250, %v248
    %v281 = vpack.c.b16 %v253, %v251
    %v282 = vpack.c.b16 %v254, %v252
    %v283 = vpack.c.b16 %v257, %v255
    %v284 = vpack.c.b16 %v258, %v256
    %v285 = vpack.c.b16 %v261, %v259
    %v286 = vpack.c.b16 %v262, %v260
    %v287 = vpack.c.b16 %v265, %v263
    %v288 = vpack.c.b16 %v266, %v264
    %v289 = vpack.c.b16 %v269, %v267
    %v290 = vpack.c.b16 %v270, %v268
    %v291 = vpack.c.b16 %v273, %v271
    %v292 = vpack.c.b16 %v274, %v272
    %v293 = vpack.c.b16 %v277, %v275
    %v294 = vpack.c.b16 %v278, %v276
    %311 = vmatprep.subr.bf16.mxu0 %v280
    %312 = vmatpush1.bf16.msra.mxu0 %v279
    %313 = vmatprep.subr.bf16.mxu0 %v282
    %314 = vmatpush1.bf16.msra.mxu0 %v281
    %315 = vmatprep.subr.bf16.mxu0 %v284
    %316 = vmatpush1.bf16.msra.mxu0 %v283
    %317 = vmatprep.subr.bf16.mxu0 %v286
    %318 = vmatpush1.bf16.msra.mxu0 %v285
    %319 = vmatprep.subr.bf16.mxu0 %v288
    %320 = vmatpush1.bf16.msra.mxu0 %v287
    %321 = vmatprep.subr.bf16.mxu0 %v290
    %322 = vmatpush1.bf16.msra.mxu0 %v289
    %323 = vmatprep.subr.bf16.mxu0 %v292
    %324 = vmatpush1.bf16.msra.mxu0 %v291
    %325 = vmatprep.subr.bf16.mxu0 %v294
    %326 = vmatpush1.bf16.msra.mxu0 %v293
    %327 = vmatprep.subr.bf16.mxu0 0
    %328 = vmatpush1.bf16.msra.mxu0 0
    %329 = vmatprep.subr.bf16.mxu0 0
    %330 = vmatpush1.bf16.msra.mxu0 0
    %331 = vmatprep.subr.bf16.mxu0 0
    %332 = vmatpush1.bf16.msra.mxu0 0
    %333 = vmatprep.subr.bf16.mxu0 0
    %334 = vmatpush1.bf16.msra.mxu0 0
    %335 = vmatprep.subr.bf16.mxu0 0
    %336 = vmatpush1.bf16.msra.mxu0 0
    %337 = vmatprep.subr.bf16.mxu0 0
    %338 = vmatpush1.bf16.msra.mxu0 0
    %339 = vmatprep.subr.bf16.mxu0 0
    %340 = vmatpush1.bf16.msra.mxu0 0
    %341 = vmatprep.subr.bf16.mxu0 0
    %342 = vmatpush1.bf16.msra.mxu0 0
    %343 = vmatprep.mubr.bf16.mxu0 0
    %344 = vmatmul.mubr.bf16.gmra.mrb[0].mxu0 %v195
    %v345 = vpop.f32.mrb[0].mxu0
    %v346 = vadd.f32 %v226, %v345
    %v347 = vpop.f32.mrb[0].mxu0
    %v348 = vadd.f32 %v230, %v347
    %v349 = vpop.f32.mrb[0].mxu0
    %v350 = vadd.f32 %v226, %v349
    %v351 = vpop.f32.mrb[0].mxu0
    %v352 = vadd.f32 %v230, %v351
    %353 = vdwg.mxu0
    %v354 = vadd.f32 %v346, %v348
    %355 = vadd.xlane.f32.xlu0 %v354
    %v356 = vpop.xlane.xlu0 %355
    %v357 = vadd.f32 %v350, %v352
    %358 = vadd.xlane.f32.xlu0 %v357
    %v359 = vpop.xlane.xlu0 %358
    %v360 = vmul.f32 %v346, %v346
    %v361 = vmul.f32 %v348, %v348
    %v362 = vmul.f32 %v350, %v350
    %v363 = vmul.f32 %v352, %v352
    %v364 = vadd.f32 %v360, %v361
    %365 = vadd.xlane.f32.xlu0 %v364
    %v366 = vpop.xlane.xlu0 %365
    %v367 = vadd.f32 %v362, %v363
    %368 = vadd.xlane.f32.xlu0 %v367
    %v369 = vpop.xlane.xlu0 %368
    %v370 = vmul.f32 %v356, 0.00390625
    %v371 = vmul.f32 %v359, 0.00390625
    %v372 = vmul.f32 %v366, 0.00390625
    %v373 = vmul.f32 %v369, 0.00390625
    %v374 = vmul.f32 %v370, %v370
    %v375 = vmul.f32 %v371, %v371
    %v376 = vsub.f32 %v372, %v374
    %v377 = vsub.f32 %v373, %v375
    %v378 = vmax.f32 %v376, 0.0
    %v379 = vmax.f32 %v377, 0.0
    %v380 = vsub.f32 %v346, %v370
    %v381 = vsub.f32 %v348, %v370
    %v382 = vsub.f32 %v350, %v371
    %v383 = vsub.f32 %v352, %v371
    %v384 = vadd.f32 %v378, 1e-05
    %v385 = vadd.f32 %v379, 1e-05
    %v386 = vrsqrt.pop %v384
    %v387 = vrsqrt.pop %v385
    %v388 = vmul.f32 %v380, %v386
    %v389 = vmul.f32 %v381, %v386
    %v390 = vmul.f32 %v382, %v387
    %v391 = vmul.f32 %v383, %v387
    %v392 = vlaneseq
    %v393 = vshrl.u32 %v392, 7
    %v394 = vsub.s32 1, %v393
    %v395 = vrot.slane %v84, %v394
    %v396 = vlaneseq
    %v397 = vshrl.u32 %v396, 7
    %v398 = vsub.s32 5, %v397
    %v399 = vrot.slane %v84, %v398
    %v402 = vlaneseq
    %v403 = vshrl.u32 %v402, 7
    %v404 = vsub.s32 1, %v403
    %v405 = vrot.slane %v395, %v404
    %v406 = vlaneseq
    %v407 = vshrl.u32 %v406, 7
    %v408 = vsub.s32 1, %v407
    %v409 = vrot.slane %v399, %v408
    %v410 = vmul.f32 %v388, %v405
    %v411 = vmul.f32 %v389, %v409
    %v412 = vmul.f32 %v390, %v405
    %v413 = vmul.f32 %v391, %v409
    %v414 = vlaneseq
    %v415 = vshrl.u32 %v414, 7
    %v416 = vsub.s32 2, %v415
    %v417 = vrot.slane %v84, %v416
    %v418 = vlaneseq
    %v419 = vshrl.u32 %v418, 7
    %v420 = vsub.s32 6, %v419
    %v421 = vrot.slane %v84, %v420
    %v424 = vlaneseq
    %v425 = vshrl.u32 %v424, 7
    %v426 = vsub.s32 2, %v425
    %v427 = vrot.slane %v417, %v426
    %v428 = vlaneseq
    %v429 = vshrl.u32 %v428, 7
    %v430 = vsub.s32 2, %v429
    %v431 = vrot.slane %v421, %v430
    %v432 = vadd.f32 %v410, %v427
    %v433 = vadd.f32 %v411, %v431
    %v434 = vadd.f32 %v412, %v427
    %v435 = vadd.f32 %v413, %v431
    %v436 = vmax.f32 %v432, 0.0
    %v437 = vmax.f32 %v433, 0.0
    %v438 = vmax.f32 %v434, 0.0
    %v439 = vmax.f32 %v435, 0.0
    %v440 = vpack.c.bf16 %v438, %v436
    %v441 = vpack.c.bf16 %v439, %v437
    %v442 = vld [vmem:[#allocation8] sm:$0xf]
    %v443 = vld [vmem:[#allocation8 + $0x4] sm:$0xf]
    %v444 = vld [vmem:[#allocation8 + $0x8] sm:$0xf]
    %v445 = vld [vmem:[#allocation8 + $0xc] sm:$0xf]
    %v446 = vld [vmem:[#allocation8 + $0x10] sm:$0xf]
    %v447 = vld [vmem:[#allocation8 + $0x14] sm:$0xf]
    %v448 = vld [vmem:[#allocation8 + $0x18] sm:$0xf]
    %v449 = vld [vmem:[#allocation8 + $0x1c] sm:$0xf]
    %v450 = vld [vmem:[#allocation8 + $0x20] sm:$0xf]
    %v451 = vld [vmem:[#allocation8 + $0x24] sm:$0xf]
    %v452 = vld [vmem:[#allocation8 + $0x28] sm:$0xf]
    %v453 = vld [vmem:[#allocation8 + $0x2c] sm:$0xf]
    %v454 = vld [vmem:[#allocation8 + $0x30] sm:$0xf]
    %v455 = vld [vmem:[#allocation8 + $0x34] sm:$0xf]
    %v456 = vld [vmem:[#allocation8 + $0x38] sm:$0xf]
    %v457 = vld [vmem:[#allocation8 + $0x3c] sm:$0xf]
    %v458 = vld [vmem:[#allocation8 + $0x40] sm:$0xf]
    %v459 = vld [vmem:[#allocation8 + $0x44] sm:$0xf]
    %v460 = vld [vmem:[#allocation8 + $0x48] sm:$0xf]
    %v461 = vld [vmem:[#allocation8 + $0x4c] sm:$0xf]
    %v462 = vld [vmem:[#allocation8 + $0x50] sm:$0xf]
    %v463 = vld [vmem:[#allocation8 + $0x54] sm:$0xf]
    %v464 = vld [vmem:[#allocation8 + $0x58] sm:$0xf]
    %v465 = vld [vmem:[#allocation8 + $0x5c] sm:$0xf]
    %v466 = vld [vmem:[#allocation8 + $0x60] sm:$0xf]
    %v467 = vld [vmem:[#allocation8 + $0x64] sm:$0xf]
    %v468 = vld [vmem:[#allocation8 + $0x68] sm:$0xf]
    %v469 = vld [vmem:[#allocation8 + $0x6c] sm:$0xf]
    %v470 = vld [vmem:[#allocation8 + $0x70] sm:$0xf]
    %v471 = vld [vmem:[#allocation8 + $0x74] sm:$0xf]
    %v472 = vld [vmem:[#allocation8 + $0x78] sm:$0xf]
    %v473 = vld [vmem:[#allocation8 + $0x7c] sm:$0xf]
    %v474 = vld [vmem:[%s6] sm:$0x1]
    %v476 = vlaneseq
    %v477 = vshrl.u32 %v476, 7
    %v478 = vsub.s32 0, %v477
    %v479 = vrot.slane %v474, %v478
    %v513 = vunpack.c.l.b16 %v442
    %v514 = vunpack.c.l.b16 %v443
    %v515 = vunpack.c.l.b16 %v444
    %v516 = vunpack.c.l.b16 %v445
    %v517 = vunpack.c.l.b16 %v446
    %v518 = vunpack.c.l.b16 %v447
    %v519 = vunpack.c.l.b16 %v448
    %v520 = vunpack.c.l.b16 %v449
    %v521 = vunpack.c.l.b16 %v450
    %v522 = vunpack.c.l.b16 %v451
    %v523 = vunpack.c.l.b16 %v452
    %v524 = vunpack.c.l.b16 %v453
    %v525 = vunpack.c.l.b16 %v454
    %v526 = vunpack.c.l.b16 %v455
    %v527 = vunpack.c.l.b16 %v456
    %v528 = vunpack.c.l.b16 %v457
    %v529 = vunpack.c.l.b16 %v458
    %v530 = vunpack.c.l.b16 %v459
    %v531 = vunpack.c.l.b16 %v460
    %v532 = vunpack.c.l.b16 %v461
    %v533 = vunpack.c.l.b16 %v462
    %v534 = vunpack.c.l.b16 %v463
    %v535 = vunpack.c.l.b16 %v464
    %v536 = vunpack.c.l.b16 %v465
    %v537 = vunpack.c.l.b16 %v466
    %v538 = vunpack.c.l.b16 %v467
    %v539 = vunpack.c.l.b16 %v468
    %v540 = vunpack.c.l.b16 %v469
    %v541 = vunpack.c.l.b16 %v470
    %v542 = vunpack.c.l.b16 %v471
    %v543 = vunpack.c.l.b16 %v472
    %v544 = vunpack.c.l.b16 %v473
    %v545 = vpack.c.b16 %v514, %v513
    %v546 = vpack.c.b16 %v516, %v515
    %v547 = vpack.c.b16 %v518, %v517
    %v548 = vpack.c.b16 %v520, %v519
    %v549 = vpack.c.b16 %v522, %v521
    %v550 = vpack.c.b16 %v524, %v523
    %v551 = vpack.c.b16 %v526, %v525
    %v552 = vpack.c.b16 %v528, %v527
    %v553 = vpack.c.b16 %v530, %v529
    %v554 = vpack.c.b16 %v532, %v531
    %v555 = vpack.c.b16 %v534, %v533
    %v556 = vpack.c.b16 %v536, %v535
    %v557 = vpack.c.b16 %v538, %v537
    %v558 = vpack.c.b16 %v540, %v539
    %v559 = vpack.c.b16 %v542, %v541
    %v560 = vpack.c.b16 %v544, %v543
    %577 = vmatprep.subr.bf16.mxu0 0
    %578 = vmatpush1.bf16.msra.mxu0 %v545
    %579 = vmatprep.subr.bf16.mxu0 0
    %580 = vmatpush1.bf16.msra.mxu0 %v546
    %581 = vmatprep.subr.bf16.mxu0 0
    %582 = vmatpush1.bf16.msra.mxu0 %v547
    %583 = vmatprep.subr.bf16.mxu0 0
    %584 = vmatpush1.bf16.msra.mxu0 %v548
    %585 = vmatprep.subr.bf16.mxu0 0
    %586 = vmatpush1.bf16.msra.mxu0 %v549
    %587 = vmatprep.subr.bf16.mxu0 0
    %588 = vmatpush1.bf16.msra.mxu0 %v550
    %589 = vmatprep.subr.bf16.mxu0 0
    %590 = vmatpush1.bf16.msra.mxu0 %v551
    %591 = vmatprep.subr.bf16.mxu0 0
    %592 = vmatpush1.bf16.msra.mxu0 %v552
    %593 = vmatprep.subr.bf16.mxu0 0
    %594 = vmatpush1.bf16.msra.mxu0 %v553
    %595 = vmatprep.subr.bf16.mxu0 0
    %596 = vmatpush1.bf16.msra.mxu0 %v554
    %597 = vmatprep.subr.bf16.mxu0 0
    %598 = vmatpush1.bf16.msra.mxu0 %v555
    %599 = vmatprep.subr.bf16.mxu0 0
    %600 = vmatpush1.bf16.msra.mxu0 %v556
    %601 = vmatprep.subr.bf16.mxu0 0
    %602 = vmatpush1.bf16.msra.mxu0 %v557
    %603 = vmatprep.subr.bf16.mxu0 0
    %604 = vmatpush1.bf16.msra.mxu0 %v558
    %605 = vmatprep.subr.bf16.mxu0 0
    %606 = vmatpush1.bf16.msra.mxu0 %v559
    %607 = vmatprep.subr.bf16.mxu0 0
    %608 = vmatpush1.bf16.msra.mxu0 %v560
    %609 = vmatprep.mubr.bf16.mxu0 %v441
    %610 = vmatmul.mubr.bf16.gmra.mrb[0].mxu0 %v440
    %v611 = vpop.f32.mrb[0].mxu0
    %v612 = vadd.f32 %v479, %v611
    %v613 = vpop.f32.mrb[0].mxu0
    %v614 = vpop.f32.mrb[0].mxu0
    %v615 = vadd.f32 %v479, %v614
    %v616 = vpop.f32.mrb[0].mxu0
    %617 = vdwg.mxu0
    %v618 = vtanh.pop %v612
    %v619 = vtanh.pop %v615
    %v620 = vpack.c.bf16 %v619, %v618
    %v622 = vunpack.c.l.b16 %v620
    %v623 = vunpack.c.h.b16 %v620
    %v624 = vpack.c.b16 %v622, %v622
    %v625 = vpack.c.b16 %v623, %v623
    %628 = vst [vmem:[#allocation10] sm:$0xf] %v624
    %629 = vst [vmem:[#allocation10 + $0x4] sm:$0xf] %v625
    // Predicated region
    $region46: #{tpu_custom_call.1} parent=1 // pred_check
      _
    $region47: #{tpu_custom_call.1} parent=1 // pred_check_branch
      %631 = sbr.rel (0) target = $region49
    $region48: #{tpu_custom_call.1} parent=1 // pred_region
      %s633 = ssub.s32 128, 128
      %634 = vsyncadd [#allocation4], %s633
      %s635 = sshll.u32 [#allocation10], 4
      %s636 = int_to_ptr.vmem [resolvable:$true] %s635
      %641 = dma.vmem_to_hbm [thread:$0]  %s636, 128, %s7, [#allocation4], 64, 64, 4
    $region49: #{tpu_custom_call.1} parent=1 // pred_fallthru
      _
    // Predicated region
    $region50: #{tpu_custom_call.1} parent=1 // pred_check
      _
    $region51: #{tpu_custom_call.1} parent=1 // pred_check_branch
      %643 = sbr.rel (0) target = $region53
    $region52: #{tpu_custom_call.1} parent=1 // pred_region
      %644 = dma.done [#allocation4], 128
    $region53: #{tpu_custom_call.1} parent=1 // pred_fallthru
      _
    %645 = vsyncpa [#allocation3], 1
    %646 = vsyncpa [#allocation6], 1
    %647 = vsyncpa [#allocation9], 1
    %648 = vsyncpa [#allocation4], 1

</llo_original>
